<compile_context>
chip_gen: v5e
topology: v5e:2x2
jax: 0.10.0
libtpu: 0.0.40
codegen_flags: <defaults>
</compile_context>

<pallas_src>
import jax
import jax.numpy as jnp
from jax.experimental import pallas as pl
from jax.experimental.pallas import tpu as pltpu  # noqa: F401  (TPU backend import)

REPEATS = 24  # torch.cat([a]*24, dim=1)


def add_cat_kernel(x1_ref, x2_ref, o_ref):
    # Single invocation: one full-block add, then emit all 24 replicas with one
    # lane-dense full-block store of the final concat layout (rows, 24*cols).
    a = x1_ref[...] + x2_ref[...]
    o_ref[...] = jnp.tile(a, (1, REPEATS))


def add_and_cat(x1, x2):
    assert x1.shape == x2.shape and x1.ndim == 2
    rows, cols = x1.shape

    return pl.pallas_call(
        add_cat_kernel,
        out_shape=jax.ShapeDtypeStruct((rows, REPEATS * cols), x1.dtype),
        # No grid: single kernel step, full-array blocks (block dims equal the
        # full array dims, so the (8,128) rule is satisfied at tiny shapes).
        in_specs=[
            pl.BlockSpec((rows, cols), lambda: (0, 0)),
            pl.BlockSpec((rows, cols), lambda: (0, 0)),
        ],
        out_specs=pl.BlockSpec((rows, REPEATS * cols), lambda: (0, 0)),
    )(x1, x2)


if __name__ == "__main__":
    key = jax.random.PRNGKey(0)
    k1, k2 = jax.random.split(key)
    # Small shapes consistent with the module's example tensors (rows=5, cols=4).
    x1 = jax.random.normal(k1, (5, 4), dtype=jnp.float32)
    x2 = jax.random.normal(k2, (5, 4), dtype=jnp.float32)

    out = add_and_cat(x1, x2)
    out = jax.block_until_ready(out)

    # Pure-JAX reference of the (repaired) semantics.
    a_ref = x1 + x2
    ref = jnp.concatenate([a_ref] * REPEATS, axis=1)

    assert out.shape == (5, 4 * REPEATS), out.shape
    assert jnp.allclose(out, ref, atol=1e-6, rtol=1e-6)
    print("KERNEL_OK")
</pallas_src>

<mosaic_0001>
module attributes {stable_mosaic.version = 11 : i64} {
  func.func @add_cat_kernel(%arg0: memref<5x4xf32, #tpu.memory_space<vmem>>, %arg1: memref<5x4xf32, #tpu.memory_space<vmem>>, %arg2: memref<5x96xf32, #tpu.memory_space<vmem>>) attributes {dimension_semantics = [], scalar_prefetch = 0 : i64, scratch_operands = 0 : i64, tpu.core_type = #tpu.core_type<tc>} {
    %c0 = arith.constant 0 : index
    %c0_0 = arith.constant 0 : index
    %0 = vector.load %arg0[%c0, %c0_0] : memref<5x4xf32, #tpu.memory_space<vmem>>, vector<5x4xf32>
    %c0_1 = arith.constant 0 : index
    %c0_2 = arith.constant 0 : index
    %1 = vector.load %arg1[%c0_1, %c0_2] : memref<5x4xf32, #tpu.memory_space<vmem>>, vector<5x4xf32>
    %2 = arith.addf %0, %1 : vector<5x4xf32>
    %3 = tpu.concatenate %2, %2, %2, %2, %2, %2, %2, %2, %2, %2, %2, %2, %2, %2, %2, %2, %2, %2, %2, %2, %2, %2, %2, %2 in 1 : vector<5x4xf32>, vector<5x4xf32>, vector<5x4xf32>, vector<5x4xf32>, vector<5x4xf32>, vector<5x4xf32>, vector<5x4xf32>, vector<5x4xf32>, vector<5x4xf32>, vector<5x4xf32>, vector<5x4xf32>, vector<5x4xf32>, vector<5x4xf32>, vector<5x4xf32>, vector<5x4xf32>, vector<5x4xf32>, vector<5x4xf32>, vector<5x4xf32>, vector<5x4xf32>, vector<5x4xf32>, vector<5x4xf32>, vector<5x4xf32>, vector<5x4xf32>, vector<5x4xf32> -> vector<5x96xf32>
    %c0_3 = arith.constant 0 : index
    %c0_4 = arith.constant 0 : index
    %4 = vector.load %arg2[%c0_3, %c0_4] : memref<5x96xf32, #tpu.memory_space<vmem>>, vector<5x96xf32>
    tpu.vector_store %arg2[%c0_3, %c0_4], %3 {strides = array<i32>} : memref<5x96xf32, #tpu.memory_space<vmem>>, vector<5x96xf32>,
    return
  }
}

</mosaic_0001>

<llo_original>
// kernel: tpu_custom_call.1
$region0: #{tpu_custom_call.1}
  #allocation0 [shape = 'u32[]', space=smem, size = 0x4, offset = 0x4, fixed_abs, tag = 'smem constant byte address 0x4 - core index']
  #allocation1 [shape = 'u32[72,128]{1,0:T(1,128)}', space=vmem, size = 0x9000, scoped, tag = 'internal scratch']
  %s0 = inlined_call_operand.vmem [shape: f32[5,4], index: 0, kind: input, shape index: {}]
  %s1 = inlined_call_operand.vmem [shape: f32[5,4], index: 1, kind: input, shape index: {}]
  %s2 = inlined_call_operand.hbm [shape: f32[5,96], index: 2, kind: output, shape index: {}]
  %s3 = sld [smem:[#allocation0]]
  $region18: #{tpu_custom_call.1} parent=0
    _
  %s5 = ssub.s32 1, %s3
  %s6 = scalar_select 0, %s5, %s3
  $region1: #{tpu_custom_call.1} parent=0
    #allocation2 [shape = 'u8[4096]{0}', space=vmem, size = 0x1000, scoped, tag = 'output window, operand 0, single buffered']
    #allocation3 [shape = 's32[1]{0}', space=sflag, size = 0x4, scoped, tag = 'scoped memory for tpu_custom_call.1']
    %7 = vsyncpa [#allocation3], 0
    // Predicated region
    $region2: #{tpu_custom_call.1} parent=1 // pred_check
      _
    $region3: #{tpu_custom_call.1} parent=1 // pred_check_branch
      %9 = sbr.rel (0) target = $region5
    $region4: #{tpu_custom_call.1} parent=1 // pred_region
      _
    $region5: #{tpu_custom_call.1} parent=1 // pred_fallthru
      _
    // Predicated region
    $region6: #{tpu_custom_call.1} parent=1 // pred_check
      _
    $region7: #{tpu_custom_call.1} parent=1 // pred_check_branch
      %11 = sbr.rel (0) target = $region9
    $region8: #{tpu_custom_call.1} parent=1 // pred_region
      _
    $region9: #{tpu_custom_call.1} parent=1 // pred_fallthru
      _
    %v12 = vld [vmem:[%s0] sm:$0x1f]
    %v13 = vld [vmem:[%s1] sm:$0x1f]
    %v14 = vadd.f32 %v12, %v13
    %16 = vrot.lane.b32.xlu0 %v14, 4
    %v17 = vpop.permute.xlu0 %16
    %19 = vrot.lane.b32.xlu0 %v14, 8
    %v20 = vpop.permute.xlu0 %19
    %22 = vrot.lane.b32.xlu0 %v14, 12
    %v23 = vpop.permute.xlu0 %22
    %25 = vrot.lane.b32.xlu0 %v14, 16
    %v26 = vpop.permute.xlu0 %25
    %28 = vrot.lane.b32.xlu0 %v14, 20
    %v29 = vpop.permute.xlu0 %28
    %31 = vrot.lane.b32.xlu0 %v14, 24
    %v32 = vpop.permute.xlu0 %31
    %34 = vrot.lane.b32.xlu0 %v14, 28
    %v35 = vpop.permute.xlu0 %34
    %37 = vrot.lane.b32.xlu0 %v14, 32
    %v38 = vpop.permute.xlu0 %37
    %40 = vrot.lane.b32.xlu0 %v14, 36
    %v41 = vpop.permute.xlu0 %40
    %43 = vrot.lane.b32.xlu0 %v14, 40
    %v44 = vpop.permute.xlu0 %43
    %46 = vrot.lane.b32.xlu0 %v14, 44
    %v47 = vpop.permute.xlu0 %46
    %49 = vrot.lane.b32.xlu0 %v14, 48
    %v50 = vpop.permute.xlu0 %49
    %52 = vrot.lane.b32.xlu0 %v14, 52
    %v53 = vpop.permute.xlu0 %52
    %55 = vrot.lane.b32.xlu0 %v14, 56
    %v56 = vpop.permute.xlu0 %55
    %58 = vrot.lane.b32.xlu0 %v14, 60
    %v59 = vpop.permute.xlu0 %58
    %61 = vrot.lane.b32.xlu0 %v14, 64
    %v62 = vpop.permute.xlu0 %61
    %64 = vrot.lane.b32.xlu0 %v14, 68
    %v65 = vpop.permute.xlu0 %64
    %67 = vrot.lane.b32.xlu0 %v14, 72
    %v68 = vpop.permute.xlu0 %67
    %70 = vrot.lane.b32.xlu0 %v14, 76
    %v71 = vpop.permute.xlu0 %70
    %73 = vrot.lane.b32.xlu0 %v14, 80
    %v74 = vpop.permute.xlu0 %73
    %76 = vrot.lane.b32.xlu0 %v14, 84
    %v77 = vpop.permute.xlu0 %76
    %79 = vrot.lane.b32.xlu0 %v14, 88
    %v80 = vpop.permute.xlu0 %79
    %82 = vrot.lane.b32.xlu0 %v14, 92
    %v83 = vpop.permute.xlu0 %82
    %vm85 = vcmask 31744
    %v86 = vsel %vm85, %v14, %v17
    %vm87 = vcmask 64512
    %v88 = vsel %vm87, %v86, %v20
    %vm89 = vcmask 97280
    %v90 = vsel %vm89, %v88, %v23
    %vm91 = vcmask 130048
    %v92 = vsel %vm91, %v90, %v26
    %vm93 = vcmask 162816
    %v94 = vsel %vm93, %v92, %v29
    %vm95 = vcmask 195584
    %v96 = vsel %vm95, %v94, %v32
    %vm97 = vcmask 228352
    %v98 = vsel %vm97, %v96, %v35
    %vm99 = vcmask 261120
    %v100 = vsel %vm99, %v98, %v38
    %vm101 = vcmask 293888
    %v102 = vsel %vm101, %v100, %v41
    %vm103 = vcmask 326656
    %v104 = vsel %vm103, %v102, %v44
    %vm105 = vcmask 359424
    %v106 = vsel %vm105, %v104, %v47
    %vm107 = vcmask 392192
    %v108 = vsel %vm107, %v106, %v50
    %vm109 = vcmask 424960
    %v110 = vsel %vm109, %v108, %v53
    %vm111 = vcmask 457728
    %v112 = vsel %vm111, %v110, %v56
    %vm113 = vcmask 490496
    %v114 = vsel %vm113, %v112, %v59
    %vm115 = vcmask 523264
    %v116 = vsel %vm115, %v114, %v62
    %vm117 = vcmask 556032
    %v118 = vsel %vm117, %v116, %v65
    %vm119 = vcmask 588800
    %v120 = vsel %vm119, %v118, %v68
    %vm121 = vcmask 621568
    %v122 = vsel %vm121, %v120, %v71
    %vm123 = vcmask 654336
    %v124 = vsel %vm123, %v122, %v74
    %vm125 = vcmask 687104
    %v126 = vsel %vm125, %v124, %v77
    %vm127 = vcmask 719872
    %v128 = vsel %vm127, %v126, %v80
    %vm129 = vcmask 752640
    %v130 = vsel %vm129, %v128, %v83
    %vm131 = vcmask 782336
    %132 = vst.msk [vmem:[#allocation2] sm:$0x1f] %vm131, %v130
    // Predicated region
    $region10: #{tpu_custom_call.1} parent=1 // pred_check
      _
    $region11: #{tpu_custom_call.1} parent=1 // pred_check_branch
      %134 = sbr.rel (0) target = $region13
    $region12: #{tpu_custom_call.1} parent=1 // pred_region
      %136 = vsyncadd [#allocation3], 0
      %s138 = sshll.u32 [#allocation2], 4
      %s139 = int_to_ptr.vmem [resolvable:$true] %s138
      %s140 = sshll.u32 %s2, 4
      %s141 = int_to_ptr.hbm [resolvable:$true] %s140
      %143 = dma.vmem_to_hbm [thread:$0]  %s139, 128, %s141, [#allocation3]
    $region13: #{tpu_custom_call.1} parent=1 // pred_fallthru
      _
    // Predicated region
    $region14: #{tpu_custom_call.1} parent=1 // pred_check
      _
    $region15: #{tpu_custom_call.1} parent=1 // pred_check_branch
      %145 = sbr.rel (0) target = $region17
    $region16: #{tpu_custom_call.1} parent=1 // pred_region
      %147 = dma.done [#allocation3], 128
    $region17: #{tpu_custom_call.1} parent=1 // pred_fallthru
      _
    %148 = vsyncpa [#allocation3], 1

</llo_original>
